<compile_context>
chip_gen: v7x
topology: tpu7x:2x2x1
jax: 0.10.0
libtpu: 0.0.40
codegen_flags: <defaults>
</compile_context>

<pallas_src>
import functools

import jax
import jax.numpy as jnp
import numpy as np
from jax.experimental import pallas as pl
from jax.experimental.pallas import tpu as pltpu


def _round_up(x, n):
    return ((x + n - 1) // n) * n


def _vmem_capacity_bytes():
    """Physical VMEM of the local TPU (falls back to the smallest, v7x-sized)."""
    try:
        return int(pltpu.get_tpu_info().vmem_capacity_bytes)
    except Exception:
        return 64 * 1024 * 1024


def _vmem_estimate(tb, dim, c_pad):
    """Rough per-kernel VMEM footprint (bytes) for the resident-W design."""
    return (2 * tb * dim * 2           # bf16 X tile, double-buffered
            + 2 * c_pad * dim * 2      # resident bf16 W-hat (2 pipeline buffers)
            + 2 * c_pad * 4            # resident s*m_list
            + 2 * tb * 4 * 2           # targets + ||x||^2 tiles
            + 2 * 8 * 128 * 4          # output tile
            + 8 * tb * c_pad * 4)      # live [tb, C_pad] f32 temporaries


def _loss_kernel(x_ref, w_ref, mlist_ref, tgt_ref, xsq_ref, out_ref, *,
                 s, eps, valid_b, valid_c):
    i = pl.program_id(0)
    tb = x_ref.shape[0]
    c_pad = w_ref.shape[0]

    # MXU: bf16 X tile x bf16 row-normalized W, f32 accumulation, contracting D
    # of both operands (no in-kernel transpose).  Result is x . w_hat = cos*||x||.
    cos_hat = jax.lax.dot_general(
        x_ref[...], w_ref[...],
        dimension_numbers=(((1,), (1,)), ((), ())),
        preferred_element_type=jnp.float32)                       # [tb, C_pad]

    # cos = (x . w_hat) / max(||x||, eps).  ||x||^2 arrives precomputed in f32,
    # so the rsqrt / max are a [tb, 1] column instead of a [tb, C] slab; s is
    # folded into the same broadcast scale (m_list is pre-scaled by s).
    scale = s * jax.lax.rsqrt(jnp.maximum(xsq_ref[...], eps * eps))   # [tb, 1]

    # Label-aware margin at the target class only (pure VPU, no one-hot matmul).
    cls_ids = jax.lax.broadcasted_iota(jnp.int32, (tb, c_pad), 1)
    tgt_mask = cls_ids == tgt_ref[...]                            # [tb, C_pad]
    margins = jnp.where(tgt_mask, mlist_ref[...], 0.0)            # s*m_list[target]
    logits = cos_hat * scale - margins                            # s*(cos - m*onehot)

    # Padded class columns (zero weight rows) must not leak into the logsumexp.
    if valid_c < c_pad:
        logits = jnp.where(cls_ids < valid_c, logits, jnp.float32(-1e30))

    # Cross entropy: logsumexp(logits) - logits[target], max-subtracted.
    row_max = jnp.max(logits, axis=1, keepdims=True)
    sum_exp = jnp.sum(jnp.exp(logits - row_max), axis=1, keepdims=True)
    lse = row_max + jnp.log(sum_exp)
    tgt_logit = jnp.sum(jnp.where(tgt_mask, logits, 0.0), axis=1, keepdims=True)
    per_row = lse - tgt_logit                                     # [tb, 1]

    # Zero padded batch rows; emit this tile's partial sum broadcast across the
    # (8, 128) output tile so the store stays lane-dense / unmasked.
    row_ids = i * tb + jax.lax.broadcasted_iota(jnp.int32, (tb, 1), 0)
    per_row = jnp.where(row_ids < valid_b, per_row, 0.0)
    out_ref[...] = jnp.full(out_ref.shape, jnp.sum(per_row), dtype=out_ref.dtype)


def cosine_label_aware_margin_loss(inputs, targets, fc_weights, m_list, *,
                                   s=30.0, eps=1e-8):
    """Fused Pallas forward of CosineLabelAwareMarginLoss (mean CE, weight=None)."""
    inputs = jnp.asarray(inputs, jnp.float32)
    fc_weights = jnp.asarray(fc_weights, jnp.float32)
    targets = jnp.asarray(targets, jnp.int32)
    m_list = jnp.asarray(m_list, jnp.float32)

    batch, dim = inputs.shape
    num_classes, dim_w = fc_weights.shape
    assert dim == dim_w and m_list.shape == (num_classes,) and targets.shape == (batch,)

    # Lane-pad classes so every [tb, C] slab op and the matmul N dim are
    # full-lane / unmasked (padded columns are masked out inside the kernel).
    c_pad = _round_up(num_classes, 128)

    # Generation-aware VMEM budget: ~100 MiB on v5e/v6e, ~51 MiB on v7x.
    vmem_limit = min(int(0.80 * _vmem_capacity_bytes()), 100 * 1024 * 1024)
    vmem_budget = vmem_limit - 2 * 1024 * 1024

    # Batch tile selection (see header comment).
    if batch >= 512 and _vmem_estimate(256, dim, c_pad) <= vmem_budget:
        tb = 256
    elif batch >= 128:
        tb = 128
    else:
        tb = _round_up(batch, 8)
    num_tiles = pl.cdiv(batch, tb)
    batch_pad = num_tiles * tb

    # TODO(synk): for very large C (resident W not fitting VMEM) add a C-tiled
    # grid axis with an online (flash-style) logsumexp instead of a resident W;
    # on v7x also single-buffer the constant W block (pipeline_mode) to halve
    # its footprint.
    assert _vmem_estimate(tb, dim, c_pad) <= vmem_budget, \
        "class-weight matrix too large for the resident-W kernel"

    # Pre-normalize W rows in f32 (clamped at eps), then cast to bf16: the MXU
    # matmul then yields cos * ||x|| directly and the per-element [tb, C]
    # rsqrt / max disappears from the kernel.
    w_sq = jnp.sum(fc_weights * fc_weights, axis=1, keepdims=True)
    w_hat = fc_weights * jax.lax.rsqrt(jnp.maximum(w_sq, eps * eps))
    w_bf16 = jnp.pad(w_hat.astype(jnp.bfloat16), ((0, c_pad - num_classes), (0, 0)))

    # m_list is pre-scaled by s and lane-padded; it stays VMEM-resident.
    mlist2d = jnp.pad(s * m_list, (0, c_pad - num_classes))[None, :]   # [1, C_pad] f32

    # X streams as bf16 (halves its DMA bytes and double-buffered VMEM); exact
    # f32 row norms travel separately as a tiny [B, 1] column.
    x_sq = jnp.sum(inputs * inputs, axis=1, keepdims=True)             # [B, 1] f32
    x_bf16 = inputs.astype(jnp.bfloat16)
    tgt = targets.reshape(-1, 1)
    if batch_pad != batch:
        pad_r = batch_pad - batch
        x_bf16 = jnp.pad(x_bf16, ((0, pad_r), (0, 0)))
        x_sq = jnp.pad(x_sq, ((0, pad_r), (0, 0)))
        tgt = jnp.pad(tgt, ((0, pad_r), (0, 0)))

    kernel = functools.partial(_loss_kernel, s=float(s), eps=float(eps),
                               valid_b=batch, valid_c=num_classes)
    partials = pl.pallas_call(
        kernel,
        out_shape=jax.ShapeDtypeStruct((num_tiles, 8, 128), jnp.float32),
        grid_spec=pltpu.PrefetchScalarGridSpec(
            num_scalar_prefetch=0,
            grid=(num_tiles,),
            in_specs=[
                pl.BlockSpec((tb, dim), lambda i: (i, 0)),        # X tile (bf16)
                pl.BlockSpec((c_pad, dim), lambda i: (0, 0)),     # W-hat resident (bf16)
                pl.BlockSpec((1, c_pad), lambda i: (0, 0)),       # s*m_list resident
                pl.BlockSpec((tb, 1), lambda i: (i, 0)),          # targets tile
                pl.BlockSpec((tb, 1), lambda i: (i, 0)),          # ||x||^2 tile (f32)
            ],
            out_specs=pl.BlockSpec((1, 8, 128), lambda i: (i, 0, 0)),
        ),
        compiler_params=pltpu.CompilerParams(
            dimension_semantics=("parallel",),
            vmem_limit_bytes=vmem_limit),
    )(x_bf16, w_bf16, mlist2d, tgt, x_sq)

    return jnp.sum(partials[:, 0, 0]) / batch


def _reference_loss(inputs, targets, fc_weights, m_list, *, s=30.0, eps=1e-8):
    """Pure-JAX f32 reference mirroring the PyTorch module."""
    inputs = jnp.asarray(inputs, jnp.float32)
    fc_weights = jnp.asarray(fc_weights, jnp.float32)
    ip = inputs @ fc_weights.T
    nx = jnp.sqrt(jnp.sum(inputs * inputs, axis=1))
    nw = jnp.sqrt(jnp.sum(fc_weights * fc_weights, axis=1))
    cos = ip / jnp.maximum(jnp.outer(nx, nw), eps)
    one_hot = jax.nn.one_hot(targets, fc_weights.shape[0], dtype=cos.dtype)
    outputs = s * (cos - one_hot * m_list[targets][:, None])
    logp = jax.nn.log_softmax(outputs, axis=1)
    return -jnp.mean(logp[jnp.arange(inputs.shape[0]), targets])


if __name__ == "__main__":
    key = jax.random.PRNGKey(0)
    B, D, C = 16, 64, 10
    k1, k2, k3 = jax.random.split(key, 3)
    inputs = jax.random.normal(k1, (B, D), dtype=jnp.float32)
    fc_weights = jax.random.normal(k2, (C, D), dtype=jnp.float32)
    targets = jax.random.randint(k3, (B,), 0, C, dtype=jnp.int32)

    # Module-init math (numpy, same as PyTorch __init__).
    cls_sample_num_list = np.array([500, 300, 200, 120, 80, 50, 30, 20, 10, 5],
                                   dtype=np.float64)
    s, m = 30.0, 0.4
    m_np = 1.0 / np.sqrt(np.sqrt(cls_sample_num_list))
    m_np = m_np * (m / np.max(m_np))
    m_list = jnp.asarray(m_np, dtype=jnp.float32)

    loss = cosine_label_aware_margin_loss(inputs, targets, fc_weights, m_list, s=s)
    loss = jax.block_until_ready(loss)

    ref = jax.block_until_ready(_reference_loss(inputs, targets, fc_weights, m_list, s=s))

    if not bool(jnp.isfinite(loss)):
        raise RuntimeError(f"non-finite loss from Pallas kernel: {loss}")
    err = abs(float(loss) - float(ref))
    if err > 5e-2 * (1.0 + abs(float(ref))):  # loose: bf16 MXU vs f32 reference
        raise RuntimeError(f"mismatch: pallas={float(loss):.6f} ref={float(ref):.6f}")
    print("KERNEL_OK")
</pallas_src>

<mosaic_0001>
module attributes {stable_mosaic.version = 11 : i64} {
  func.func @_loss_kernel(%arg0: i32, %arg1: memref<16x64xbf16, #tpu.memory_space<vmem>>, %arg2: memref<128x64xbf16, #tpu.memory_space<vmem>>, %arg3: memref<1x128xf32, #tpu.memory_space<vmem>>, %arg4: memref<16x1xi32, #tpu.memory_space<vmem>>, %arg5: memref<16x1xf32, #tpu.memory_space<vmem>>, %arg6: memref<1x8x128xf32, #tpu.memory_space<vmem>>) attributes {dimension_semantics = [#tpu.dimension_semantics<parallel>], iteration_bounds = array<i64: 1>, scalar_prefetch = 0 : i64, scratch_operands = 0 : i64, tpu.core_type = #tpu.core_type<tc>, window_params = [{transform_indices = @transform_0, window_bounds = array<i64: 16, 64>}, {pipeline_mode = #tpu.pipeline_mode<synchronous>, transform_indices = @transform_1, window_bounds = array<i64: 128, 64>}, {pipeline_mode = #tpu.pipeline_mode<synchronous>, transform_indices = @transform_2, window_bounds = array<i64: 1, 128>}, {transform_indices = @transform_3, window_bounds = array<i64: 16, 1>}, {transform_indices = @transform_4, window_bounds = array<i64: 16, 1>}, {transform_indices = @transform_5, window_bounds = array<i64: 1, 8, 128>}]} {
    %c0 = arith.constant 0 : index
    %c0_0 = arith.constant 0 : index
    %0 = vector.load %arg1[%c0, %c0_0] : memref<16x64xbf16, #tpu.memory_space<vmem>>, vector<16x64xbf16>
    %c0_1 = arith.constant 0 : index
    %c0_2 = arith.constant 0 : index
    %1 = vector.load %arg2[%c0_1, %c0_2] : memref<128x64xbf16, #tpu.memory_space<vmem>>, vector<128x64xbf16>
    %cst = arith.constant dense<0.000000e+00> : vector<16x128xf32>
    %2 = tpu.matmul %0, %1, %cst {dimension_numbers = #tpu.dot_dimension_numbers<[1], [1], [0], [0], [0, 0, 1, 0], [], []>} : vector<16x64xbf16>, vector<128x64xbf16>, vector<16x128xf32> -> vector<16x128xf32>
    %c0_3 = arith.constant 0 : index
    %c0_4 = arith.constant 0 : index
    %3 = vector.load %arg5[%c0_3, %c0_4] : memref<16x1xf32, #tpu.memory_space<vmem>>, vector<16x1xf32>
    %cst_5 = arith.constant 1.000000e-16 : f32
    %4 = vector.broadcast %cst_5 : f32 to vector<16x1xf32>
    %5 = arith.maximumf %3, %4 : vector<16x1xf32>
    %6 = math.rsqrt %5 : vector<16x1xf32>
    %cst_6 = arith.constant 3.000000e+01 : f32
    %7 = vector.broadcast %cst_6 : f32 to vector<16x1xf32>
    %8 = arith.mulf %7, %6 : vector<16x1xf32>
    %9 = tpu.iota {dimensions = array<i32: 1>} : vector<16x128xi32>
    %c0_7 = arith.constant 0 : index
    %c0_8 = arith.constant 0 : index
    %10 = vector.load %arg4[%c0_7, %c0_8] : memref<16x1xi32, #tpu.memory_space<vmem>>, vector<16x1xi32>
    %11 = vector.broadcast %10 : vector<16x1xi32> to vector<16x128xi32>
    %12 = arith.cmpi eq, %9, %11 : vector<16x128xi32>
    %c0_9 = arith.constant 0 : index
    %c0_10 = arith.constant 0 : index
    %13 = vector.load %arg3[%c0_9, %c0_10] : memref<1x128xf32, #tpu.memory_space<vmem>>, vector<1x128xf32>
    %cst_11 = arith.constant 0.000000e+00 : f32
    %14 = vector.shape_cast %13 : vector<1x128xf32> to vector<1x128xf32>
    %15 = vector.broadcast %14 : vector<1x128xf32> to vector<16x128xf32>
    %16 = vector.broadcast %cst_11 : f32 to vector<16x128xf32>
    %17 = arith.select %12, %15, %16 : vector<16x128xi1>, vector<16x128xf32>
    %18 = vector.broadcast %8 : vector<16x1xf32> to vector<16x128xf32>
    %19 = arith.mulf %2, %18 : vector<16x128xf32>
    %20 = arith.subf %19, %17 : vector<16x128xf32>
    %c10_i32 = arith.constant 10 : i32
    %21 = vector.broadcast %c10_i32 : i32 to vector<16x128xi32>
    %22 = arith.cmpi slt, %9, %21 : vector<16x128xi32>
    %cst_12 = arith.constant -1.000000e+30 : f32
    %23 = vector.broadcast %cst_12 : f32 to vector<16x128xf32>
    %24 = arith.select %22, %20, %23 : vector<16x128xi1>, vector<16x128xf32>
    %cst_13 = arith.constant dense<0xFF800000> : vector<16xf32>
    %25 = vector.multi_reduction <maximumf>, %24, %cst_13 [1] : vector<16x128xf32> to vector<16xf32>
    %26 = vector.shape_cast %25 : vector<16xf32> to vector<16x1xf32>
    %27 = vector.broadcast %26 : vector<16x1xf32> to vector<16x128xf32>
    %28 = arith.subf %24, %27 : vector<16x128xf32>
    %29 = math.exp %28 : vector<16x128xf32>
    %cst_14 = arith.constant dense<0.000000e+00> : vector<16xf32>
    %30 = vector.multi_reduction <add>, %29, %cst_14 [1] : vector<16x128xf32> to vector<16xf32>
    %31 = vector.shape_cast %30 : vector<16xf32> to vector<16x1xf32>
    %32 = math.log %31 : vector<16x1xf32>
    %33 = arith.addf %26, %32 : vector<16x1xf32>
    %cst_15 = arith.constant 0.000000e+00 : f32
    %34 = vector.broadcast %cst_15 : f32 to vector<16x128xf32>
    %35 = arith.select %12, %24, %34 : vector<16x128xi1>, vector<16x128xf32>
    %cst_16 = arith.constant dense<0.000000e+00> : vector<16xf32>
    %36 = vector.multi_reduction <add>, %35, %cst_16 [1] : vector<16x128xf32> to vector<16xf32>
    %37 = vector.shape_cast %36 : vector<16xf32> to vector<16x1xf32>
    %38 = arith.subf %33, %37 : vector<16x1xf32>
    %c16_i32 = arith.constant 16 : i32
    %39 = arith.muli %arg0, %c16_i32 : i32
    %40 = tpu.iota {dimensions = array<i32: 0>} : vector<16x1xi32>
    %41 = vector.broadcast %39 : i32 to vector<16x1xi32>
    %42 = arith.addi %41, %40 : vector<16x1xi32>
    %c16_i32_17 = arith.constant 16 : i32
    %43 = vector.broadcast %c16_i32_17 : i32 to vector<16x1xi32>
    %44 = arith.cmpi slt, %42, %43 : vector<16x1xi32>
    %cst_18 = arith.constant 0.000000e+00 : f32
    %45 = vector.broadcast %cst_18 : f32 to vector<16x1xf32>
    %46 = arith.select %44, %38, %45 : vector<16x1xi1>, vector<16x1xf32>
    %47 = vector.shape_cast %46 : vector<16x1xf32> to vector<1x16x1xf32>
    %cst_19 = arith.constant dense<0.000000e+00> : vector<1xf32>
    %48 = vector.multi_reduction <add>, %47, %cst_19 [1, 2] : vector<1x16x1xf32> to vector<1xf32>
    %49 = vector.shape_cast %48 : vector<1xf32> to vector<1x1x1xf32>
    %50 = vector.extract %49[0, 0, 0] : f32 from vector<1x1x1xf32>
    %51 = vector.broadcast %50 : f32 to vector<1x8x128xf32>
    %c0_20 = arith.constant 0 : index
    %c0_21 = arith.constant 0 : index
    %c0_22 = arith.constant 0 : index
    %52 = vector.load %arg6[%c0_20, %c0_21, %c0_22] : memref<1x8x128xf32, #tpu.memory_space<vmem>>, vector<1x8x128xf32>
    tpu.vector_store %arg6[%c0_20, %c0_21, %c0_22], %51 {strides = array<i32>} : memref<1x8x128xf32, #tpu.memory_space<vmem>>, vector<1x8x128xf32>,
    return
  }
  func.func @transform_0(%arg0: i32) -> (i32, i32) {
    %c0_i32 = arith.constant 0 : i32
    %c0_i32_0 = arith.constant 0 : i32
    return %arg0, %c0_i32 : i32, i32
  }
  func.func @transform_1(%arg0: i32) -> (i32, i32) {
    %c0_i32 = arith.constant 0 : i32
    %c0_i32_0 = arith.constant 0 : i32
    %c0_i32_1 = arith.constant 0 : i32
    return %c0_i32, %c0_i32_0 : i32, i32
  }
  func.func @transform_2(%arg0: i32) -> (i32, i32) {
    %c0_i32 = arith.constant 0 : i32
    %c0_i32_0 = arith.constant 0 : i32
    %c0_i32_1 = arith.constant 0 : i32
    return %c0_i32, %c0_i32_0 : i32, i32
  }
  func.func @transform_3(%arg0: i32) -> (i32, i32) {
    %c0_i32 = arith.constant 0 : i32
    %c0_i32_0 = arith.constant 0 : i32
    return %arg0, %c0_i32 : i32, i32
  }
  func.func @transform_4(%arg0: i32) -> (i32, i32) {
    %c0_i32 = arith.constant 0 : i32
    %c0_i32_0 = arith.constant 0 : i32
    return %arg0, %c0_i32 : i32, i32
  }
  func.func @transform_5(%arg0: i32) -> (i32, i32, i32) {
    %c0_i32 = arith.constant 0 : i32
    %c0_i32_0 = arith.constant 0 : i32
    %c0_i32_1 = arith.constant 0 : i32
    return %arg0, %c0_i32, %c0_i32_0 : i32, i32, i32
  }
}

</mosaic_0001>

<llo_original>
// kernel: tpu_custom_call.1
$region0: #{tpu_custom_call.1}
  #allocation0 [shape = 'u32[]', space=smem, size = 0x4, offset = 0x4, fixed_abs, tag = 'smem constant byte address 0x4 - core index']
  #allocation1 [shape = 'u32[144,128]{1,0:T(1,128)}', space=vmem, size = 0x12000, scoped, tag = 'internal scratch']
  %s0 = inlined_call_operand.vmem [shape: bf16[16,64], index: 0, kind: input, shape index: {}]
  %s1 = inlined_call_operand.vmem [shape: bf16[128,64], index: 1, kind: input, shape index: {}]
  %s2 = inlined_call_operand.vmem [shape: f32[1,128], index: 2, kind: input, shape index: {}]
  %s3 = inlined_call_operand.vmem [shape: s32[16,1], index: 3, kind: input, shape index: {}]
  %s4 = inlined_call_operand.vmem [shape: f32[16,1], index: 4, kind: input, shape index: {}]
  %s5 = inlined_call_operand.hbm [shape: f32[1,8,128], index: 5, kind: output, shape index: {}]
  %s6 = sld [smem:[#allocation0]]
  $region30: #{tpu_custom_call.1} parent=0
    _
  %s8 = ssub.s32 1, %s6
  %s9 = scalar_select 0, %s8, %s6
  $region1: #{tpu_custom_call.1} parent=0
    #allocation2 [shape = 'u8[4096]{0}', space=vmem, size = 0x1000, scoped, tag = 'output window, operand 0, single buffered']
    #allocation3 [shape = 's32[1]{0}', space=sflag, size = 0x4, scoped, tag = 'scoped memory for tpu_custom_call.1']
    %10 = vsyncpa [#allocation3], 0
    // Predicated region
    $region2: #{tpu_custom_call.1} parent=1 // pred_check
      _
    $region3: #{tpu_custom_call.1} parent=1 // pred_check_branch
      %12 = sbr.rel (0) target = $region5
    $region4: #{tpu_custom_call.1} parent=1 // pred_region
      _
    $region5: #{tpu_custom_call.1} parent=1 // pred_fallthru
      _
    // Predicated region
    $region6: #{tpu_custom_call.1} parent=1 // pred_check
      _
    $region7: #{tpu_custom_call.1} parent=1 // pred_check_branch
      %14 = sbr.rel (0) target = $region9
    $region8: #{tpu_custom_call.1} parent=1 // pred_region
      _
    $region9: #{tpu_custom_call.1} parent=1 // pred_fallthru
      _
    // Predicated region
    $region10: #{tpu_custom_call.1} parent=1 // pred_check
      _
    $region11: #{tpu_custom_call.1} parent=1 // pred_check_branch
      %16 = sbr.rel (0) target = $region13
    $region12: #{tpu_custom_call.1} parent=1 // pred_region
      _
    $region13: #{tpu_custom_call.1} parent=1 // pred_fallthru
      _
    // Predicated region
    $region14: #{tpu_custom_call.1} parent=1 // pred_check
      _
    $region15: #{tpu_custom_call.1} parent=1 // pred_check_branch
      %18 = sbr.rel (0) target = $region17
    $region16: #{tpu_custom_call.1} parent=1 // pred_region
      _
    $region17: #{tpu_custom_call.1} parent=1 // pred_fallthru
      _
    // Predicated region
    $region18: #{tpu_custom_call.1} parent=1 // pred_check
      _
    $region19: #{tpu_custom_call.1} parent=1 // pred_check_branch
      %20 = sbr.rel (0) target = $region21
    $region20: #{tpu_custom_call.1} parent=1 // pred_region
      _
    $region21: #{tpu_custom_call.1} parent=1 // pred_fallthru
      _
    %v22 = vld [vmem:[%s0] sm:$0xf]
    %v23 = vld [vmem:[%s0 + $0x4] sm:$0xf]
    %v24 = vld [vmem:[%s1] sm:$0xf]
    %v25 = vld [vmem:[%s1 + $0x4] sm:$0xf]
    %v26 = vld [vmem:[%s1 + $0x8] sm:$0xf]
    %v27 = vld [vmem:[%s1 + $0xc] sm:$0xf]
    %v28 = vld [vmem:[%s1 + $0x10] sm:$0xf]
    %v29 = vld [vmem:[%s1 + $0x14] sm:$0xf]
    %v30 = vld [vmem:[%s1 + $0x18] sm:$0xf]
    %v31 = vld [vmem:[%s1 + $0x1c] sm:$0xf]
    %v32 = vld [vmem:[%s1 + $0x20] sm:$0xf]
    %v33 = vld [vmem:[%s1 + $0x24] sm:$0xf]
    %v34 = vld [vmem:[%s1 + $0x28] sm:$0xf]
    %v35 = vld [vmem:[%s1 + $0x2c] sm:$0xf]
    %v36 = vld [vmem:[%s1 + $0x30] sm:$0xf]
    %v37 = vld [vmem:[%s1 + $0x34] sm:$0xf]
    %v38 = vld [vmem:[%s1 + $0x38] sm:$0xf]
    %v39 = vld [vmem:[%s1 + $0x3c] sm:$0xf]
    %v42 = vunpack.c.l.b16 %v22
    %v43 = vunpack.c.l.b16 %v23
    %v44 = vpack.c.b16 %v43, %v42
    %v61 = vunpack.c.l.b16 %v24
    %v62 = vunpack.c.l.b16 %v25
    %v63 = vunpack.c.l.b16 %v26
    %v64 = vunpack.c.l.b16 %v27
    %v65 = vunpack.c.l.b16 %v28
    %v66 = vunpack.c.l.b16 %v29
    %v67 = vunpack.c.l.b16 %v30
    %v68 = vunpack.c.l.b16 %v31
    %v69 = vunpack.c.l.b16 %v32
    %v70 = vunpack.c.l.b16 %v33
    %v71 = vunpack.c.l.b16 %v34
    %v72 = vunpack.c.l.b16 %v35
    %v73 = vunpack.c.l.b16 %v36
    %v74 = vunpack.c.l.b16 %v37
    %v75 = vunpack.c.l.b16 %v38
    %v76 = vunpack.c.l.b16 %v39
    %v77 = vpack.c.b16 %v62, %v61
    %v78 = vpack.c.b16 %v64, %v63
    %v79 = vpack.c.b16 %v66, %v65
    %v80 = vpack.c.b16 %v68, %v67
    %v81 = vpack.c.b16 %v70, %v69
    %v82 = vpack.c.b16 %v72, %v71
    %v83 = vpack.c.b16 %v74, %v73
    %v84 = vpack.c.b16 %v76, %v75
    %vm85 = vcmask 523264
    %v87 = vsel %vm85, %v44, 0
    %v90 = vsel %vm85, %v77, 0
    %v93 = vsel %vm85, %v78, 0
    %v96 = vsel %vm85, %v79, 0
    %v99 = vsel %vm85, %v80, 0
    %v102 = vsel %vm85, %v81, 0
    %v105 = vsel %vm85, %v82, 0
    %v108 = vsel %vm85, %v83, 0
    %v111 = vsel %vm85, %v84, 0
    %113 = vmatprep.subr.bf16.mxu0 0
    %114 = vmatpush1.bf16.xpose.msra.mxu0 %v90
    %115 = vmatprep.subr.bf16.mxu0 0
    %116 = vmatpush1.bf16.xpose.msra.mxu0 %v93
    %117 = vmatprep.subr.bf16.mxu0 0
    %118 = vmatpush1.bf16.xpose.msra.mxu0 %v96
    %119 = vmatprep.subr.bf16.mxu0 0
    %120 = vmatpush1.bf16.xpose.msra.mxu0 %v99
    %121 = vmatprep.subr.bf16.mxu0 0
    %122 = vmatpush1.bf16.xpose.msra.mxu0 %v102
    %123 = vmatprep.subr.bf16.mxu0 0
    %124 = vmatpush1.bf16.xpose.msra.mxu0 %v105
    %125 = vmatprep.subr.bf16.mxu0 0
    %126 = vmatpush1.bf16.xpose.msra.mxu0 %v108
    %127 = vmatprep.subr.bf16.mxu0 0
    %128 = vmatpush1.bf16.xpose.msra.mxu0 %v111
    %129 = vmatprep.subr.bf16.mxu0 0
    %130 = vmatpush1.bf16.xpose.msra.mxu0 0
    %131 = vmatprep.subr.bf16.mxu0 0
    %132 = vmatpush1.bf16.xpose.msra.mxu0 0
    %133 = vmatprep.subr.bf16.mxu0 0
    %134 = vmatpush1.bf16.xpose.msra.mxu0 0
    %135 = vmatprep.subr.bf16.mxu0 0
    %136 = vmatpush1.bf16.xpose.msra.mxu0 0
    %137 = vmatprep.subr.bf16.mxu0 0
    %138 = vmatpush1.bf16.xpose.msra.mxu0 0
    %139 = vmatprep.subr.bf16.mxu0 0
    %140 = vmatpush1.bf16.xpose.msra.mxu0 0
    %141 = vmatprep.subr.bf16.mxu0 0
    %142 = vmatpush1.bf16.xpose.msra.mxu0 0
    %143 = vmatprep.subr.bf16.mxu0 0
    %144 = vmatpush1.bf16.xpose.msra.mxu0 0
    %145 = vmatprep.mubr.bf16.mxu0 0
    %146 = vmatmul.mubr.bf16.gmra.mrb[0].mxu0 %v87
    %v147 = vpop.f32.mrb[0].mxu0
    %v148 = vadd.f32 0.0, %v147
    %v149 = vpop.f32.mrb[0].mxu0
    %v150 = vpop.f32.mrb[0].mxu0
    %v151 = vadd.f32 0.0, %v150
    %v152 = vpop.f32.mrb[0].mxu0
    %153 = vdwg.mxu0
    %v154 = vld [vmem:[%s4] sm:$0xff]
    %v155 = vld [vmem:[%s4 + $0x8] sm:$0xff]
    %v156 = vmax.f32 %v154, 1e-16
    %v157 = vmax.f32 %v155, 1e-16
    %v158 = vrsqrt.pop %v156
    %v159 = vrsqrt.pop %v157
    %v160 = vmul.f32 %v158, 30.0
    %v161 = vmul.f32 %v159, 30.0
    %v162 = vlaneseq
    %v163 = vand.u32 %v162, 127
    %v164 = vld [vmem:[%s3] sm:$0xff]
    %v165 = vld [vmem:[%s3 + $0x8] sm:$0xff]
    %166 = vset.pattern.permute.xlu0 0
    %167 = vperm.xlu0 %166, %v164
    %v168 = vpop.permute.xlu0 %167
    %169 = vset.pattern.permute.xlu0 0
    %170 = vperm.xlu0 %169, %v165
    %v171 = vpop.permute.xlu0 %170
    %vm172 = vcmp.eq.s32.totalorder %v163, %v168
    %vm173 = vcmp.eq.s32.totalorder %v163, %v171
    %v174 = vld [vmem:[%s2] sm:$0x1]
    %v176 = vlaneseq
    %v177 = vshrl.u32 %v176, 7
    %v178 = vsub.s32 0, %v177
    %v179 = vrot.slane %v174, %v178
    %v181 = vsel %vm172, %v179, 0.0
    %v182 = vsel %vm173, %v179, 0.0
    %184 = vset.pattern.permute.xlu0 0
    %185 = vperm.xlu0 %184, %v160
    %v186 = vpop.permute.xlu0 %185
    %189 = vset.pattern.permute.xlu0 0
    %190 = vperm.xlu0 %189, %v161
    %v191 = vpop.permute.xlu0 %190
    %v193 = vmul.f32 %v148, %v186
    %v194 = vmul.f32 %v151, %v191
    %v195 = vsub.f32 %v193, %v181
    %v196 = vsub.f32 %v194, %v182
    %vm197 = vcmp.lt.s32.totalorder %v163, 10
    %v198 = vsel %vm197, %v195, -1e+30
    %v199 = vsel %vm197, %v196, -1e+30
    %200 = vmax.xlane.f32.xlu0 %v198
    %v201 = vpop.xlane.xlu0 %200
    %202 = vmax.xlane.f32.xlu0 %v199
    %v203 = vpop.xlane.xlu0 %202
    %v204 = vsub.f32 %v198, %v201
    %v205 = vsub.f32 %v199, %v203
    %v206 = vmul.f32 %v204, 1.442695
    %v207 = vpow.pop %v206
    %v208 = vmul.f32 %v205, 1.442695
    %v209 = vpow.pop %v208
    %210 = vadd.xlane.f32.xlu0 %v207
    %v211 = vpop.xlane.xlu0 %210
    %212 = vadd.xlane.f32.xlu0 %v209
    %v213 = vpop.xlane.xlu0 %212
    %v214 = vlog2.pop %v211
    %v215 = vmul.f32 %v214, 0.6931472
    %v216 = vlog2.pop %v213
    %v217 = vmul.f32 %v216, 0.6931472
    %v218 = vadd.f32 %v201, %v215
    %v219 = vadd.f32 %v203, %v217
    %v220 = vsel %vm172, %v198, 0.0
    %v221 = vsel %vm173, %v199, 0.0
    %222 = vadd.xlane.f32.xlu0 %v220
    %v223 = vpop.xlane.xlu0 %222
    %224 = vadd.xlane.f32.xlu0 %v221
    %v225 = vpop.xlane.xlu0 %224
    %v226 = vsub.f32 %v218, %v223
    %v227 = vsub.f32 %v219, %v225
    %s228 = smul.u32 0, 16
    %v229 = vlaneseq
    %v230 = vshrl.u32 %v229, 7
    %v231 = vadd.s32 %v230, 8
    %v232 = vstv %s228
    %v233 = vadd.s32 %v232, %v230
    %v234 = vadd.s32 %v232, %v231
    %vm235 = vcmp.lt.s32.totalorder %v233, 16
    %vm236 = vcmp.lt.s32.totalorder %v234, 16
    %v237 = vsel %vm235, %v226, 0.0
    %v238 = vsel %vm236, %v227, 0.0
    %vm239 = vcmask 7168
    %v240 = vsel %vm239, %v237, 0.0
    %v241 = vsel %vm239, %v238, 0.0
    %v242 = vadd.f32 %v240, %v241
    %243 = vadd.xlane.f32.xlu0 %v242
    %v244 = vpop.xlane.xlu0 %243
    %v245 = vrot.slane %v244, 4
    %v246 = vadd.f32 %v244, %v245
    %v247 = vrot.slane %v246, 2
    %v248 = vadd.f32 %v246, %v247
    %v249 = vrot.slane %v248, 1
    %v250 = vadd.f32 %v248, %v249
    %s251 = vtos %v250
    %v252 = vstv %s251
    %253 = vst [vmem:[#allocation2] sm:$0xff] %v252
    // Predicated region
    $region22: #{tpu_custom_call.1} parent=1 // pred_check
      _
    $region23: #{tpu_custom_call.1} parent=1 // pred_check_branch
      %255 = sbr.rel (0) target = $region25
    $region24: #{tpu_custom_call.1} parent=1 // pred_region
      %s257 = ssub.s32 128, 128
      %258 = vsyncadd [#allocation3], %s257
      %s260 = sshll.u32 [#allocation2], 4
      %s261 = int_to_ptr.vmem [resolvable:$true] %s260
      %263 = dma.vmem_to_hbm [thread:$0]  %s261, 128, %s5, [#allocation3]
    $region25: #{tpu_custom_call.1} parent=1 // pred_fallthru
      _
    // Predicated region
    $region26: #{tpu_custom_call.1} parent=1 // pred_check
      _
    $region27: #{tpu_custom_call.1} parent=1 // pred_check_branch
      %265 = sbr.rel (0) target = $region29
    $region28: #{tpu_custom_call.1} parent=1 // pred_region
      %266 = dma.done [#allocation3], 128
    $region29: #{tpu_custom_call.1} parent=1 // pred_fallthru
      _
    %267 = vsyncpa [#allocation3], 1

</llo_original>
